<compile_context>
chip_gen: v6e
topology: v6e:2x2x1
jax: 0.10.0
libtpu: 0.0.40
codegen_flags: <defaults>
</compile_context>

<pallas_src>
import functools
from typing import NamedTuple, Optional

import jax
import jax.numpy as jnp
from jax.experimental import pallas as pl
from jax.experimental.pallas import tpu as pltpu


def _round_up(x: int, m: int) -> int:
    return ((x + m - 1) // m) * m


def _vmem_capacity_bytes() -> int:
    """Per-core VMEM capacity; conservative 64 MiB (v7x) fallback."""
    try:
        info = pltpu.get_tpu_info()
        cap = getattr(info, "vmem_capacity_bytes", None)
        if cap:
            return int(cap)
    except Exception:
        pass
    return 64 * 1024 * 1024


def _weight_spec(block_shape, index_map, buffer_count: Optional[int]):
    """BlockSpec with optional pipeline depth; degrades gracefully if the
    installed jax does not support pipeline_mode / pl.Buffered."""
    if buffer_count is not None and hasattr(pl, "Buffered"):
        try:
            return pl.BlockSpec(block_shape, index_map,
                                pipeline_mode=pl.Buffered(buffer_count))
        except Exception:
            pass
    return pl.BlockSpec(block_shape, index_map)


class FFNParams(NamedTuple):
    w13: jax.Array       # (dim, 2*hidden_padded), per-block interleaved [w1 | w3]
    w2t: jax.Array       # (hidden_padded, dim)
    hidden: int
    hidden_padded: int
    block_h: int


def prepare_ffn_weights(w1, w2, w3, *, block_h: Optional[int] = None,
                        compute_dtype=None) -> FFNParams:
    """Transpose / pad / fuse PyTorch-layout weights ONCE (parameter-load time).

    w1, w3: (hidden, dim)   w2: (dim, hidden)   -- nn.Linear (out, in) layout.
    Production path: compute_dtype=jnp.bfloat16 (halves weight HBM traffic and
    runs the MXU at full rate).  f32 weights are kept for testing only.
    """
    hidden, dim = w1.shape
    if compute_dtype is not None:
        w1 = w1.astype(compute_dtype)
        w2 = w2.astype(compute_dtype)
        w3 = w3.astype(compute_dtype)

    if block_h is None:
        # 128-MiB VMEM parts (v5e/v6e) -> big hidden blocks; 64-MiB v7x -> 512.
        block_h = 1024 if _vmem_capacity_bytes() >= (96 << 20) else 512

    hp = _round_up(hidden, 128)                 # lane-dense hidden
    bh = _round_up(min(block_h, hp), 128)       # hidden block (multiple of 128)
    hp = _round_up(hp, bh)                      # make bh divide hp
    nb = hp // bh

    # (in, out) layout; zero-pad hidden (silu(0)*0 == 0 and w2 pad rows are 0,
    # so padded columns contribute exactly nothing).
    w1t = jnp.zeros((dim, hp), w1.dtype).at[:, :hidden].set(w1.T)
    w3t = jnp.zeros((dim, hp), w3.dtype).at[:, :hidden].set(w3.T)
    w2t = jnp.zeros((hp, dim), w2.dtype).at[:hidden, :].set(w2.T)

    # Fuse w1/w3 so hidden block k is [w1_cols_k | w3_cols_k]:
    # one MXU matmul per block, split with static lane-aligned slices.
    w13 = jnp.concatenate(
        [w1t.reshape(dim, nb, bh), w3t.reshape(dim, nb, bh)], axis=-1
    ).reshape(dim, 2 * hp)
    # TODO(synk): optional fp8 weight quantization (v7x MXU) with per-block
    # scales folded into the accumulator for the weight-HBM-bound decode regime.
    return FFNParams(w13=w13, w2t=w2t, hidden=hidden, hidden_padded=hp, block_h=bh)


def _silu_gate(h1, h3, approx):
    # Numerically robust sigmoid: clamp exp argument; exp + rcp run on the EUP
    # slot (free when the kernel is MXU- or DMA-bound).
    e = jnp.exp(-jnp.maximum(h1, -80.0))
    return (h1 * pl.reciprocal(1.0 + e, approx=approx)) * h3


def _ffn_kernel_single(x_ref, w13_ref, w2_ref, o_ref, *, approx):
    # Hidden fits a single block: no reduction axis, no accumulator scratch.
    bh = w2_ref.shape[0]
    h13 = jnp.dot(x_ref[...], w13_ref[...], preferred_element_type=jnp.float32)
    gated = _silu_gate(h13[:, :bh], h13[:, bh:], approx)
    o_ref[...] = jnp.dot(gated.astype(w2_ref.dtype), w2_ref[...],
                         preferred_element_type=jnp.float32).astype(o_ref.dtype)


def _ffn_kernel_acc(x_ref, w13_ref, w2_ref, o_ref, acc_ref, *, approx):
    # Hidden streamed over grid axis 1 ("arbitrary"); f32 accumulator in VMEM.
    k = pl.program_id(1)

    @pl.when(k == 0)
    def _init():
        acc_ref[...] = jnp.zeros_like(acc_ref)

    bh = w2_ref.shape[0]
    h13 = jnp.dot(x_ref[...], w13_ref[...], preferred_element_type=jnp.float32)
    gated = _silu_gate(h13[:, :bh], h13[:, bh:], approx)
    acc_ref[...] += jnp.dot(gated.astype(w2_ref.dtype), w2_ref[...],
                            preferred_element_type=jnp.float32)

    @pl.when(k == pl.num_programs(1) - 1)
    def _finalize():
        o_ref[...] = acc_ref[...].astype(o_ref.dtype)


def ffn_forward(x, params: FFNParams, *, tm: Optional[int] = None):
    """x: (M, dim) -> (M, dim). Pads M to the row tile and slices back."""
    m, dim = x.shape
    hp, bh = params.hidden_padded, params.block_h
    x = x.astype(params.w13.dtype)
    itemsize = jnp.dtype(x.dtype).itemsize
    approx = (x.dtype == jnp.bfloat16)   # exact rcp for the f32 (testing) path

    vmem_cap = _vmem_capacity_bytes()
    vmem_limit = int(vmem_cap * 0.85)

    # --- row tile selection (generation / dtype aware) -----------------------
    sub_min = 16 if itemsize == 2 else 8          # bf16 sublane pack is 16
    if m >= 256:
        align = 256                                # full MXU passes on v6e/v7x
    elif m >= 128:
        align = 128                                # 128-aligned (v5e MXU is 4x128)
    else:
        align = sub_min
    if tm is None:
        tm = 1024 if vmem_cap >= (96 << 20) else 512   # prefill target per gen
    tm = min(tm, _round_up(m, align))
    tm = max(sub_min, _round_up(tm, align))

    n_hidden_blocks = hp // bh
    multi = n_hidden_blocks > 1

    def vmem_est(tm_, weight_bufs):
        w_blk = (dim * 2 * bh + bh * dim) * itemsize
        b = 2 * tm_ * dim * itemsize               # x (double-buffered)
        b += 2 * tm_ * dim * itemsize              # out
        b += weight_bufs * w_blk                   # w13 + w2 blocks
        if multi:
            b += tm_ * dim * 4                     # f32 accumulator scratch
        b += 2 * tm_ * 2 * bh * 4                  # h13 / gated f32 intermediates
        return b

    while tm > align and vmem_est(tm, 2) > vmem_limit:
        tm = max(align, _round_up(tm // 2, align))

    mp = _round_up(m, tm)
    if mp != m:
        x = jnp.pad(x, ((0, mp - m), (0, 0)))
    n_row_tiles = mp // tm

    # Decode-shaped (single row tile, hidden streamed): deepen weight buffering
    # so the DMA queue stays full while compute is idle.
    wbuf = None
    if multi and n_row_tiles == 1 and vmem_est(tm, 3) <= vmem_limit:
        wbuf = 3

    # --- cost estimate (weights re-streamed once per row tile) ---------------
    w_bytes = (params.w13.size * jnp.dtype(params.w13.dtype).itemsize
               + params.w2t.size * jnp.dtype(params.w2t.dtype).itemsize)
    flops = 6 * mp * dim * hp
    bytes_accessed = 2 * mp * dim * itemsize + w_bytes * n_row_tiles

    # --- grid / specs ---------------------------------------------------------
    if multi:
        kernel = functools.partial(_ffn_kernel_acc, approx=approx)
        grid = (n_row_tiles, n_hidden_blocks)      # reduction (hidden) axis last
        in_specs = [
            pl.BlockSpec((tm, dim), lambda i, k: (i, 0)),          # token rows
            _weight_spec((dim, 2 * bh), lambda i, k: (0, k), wbuf),  # [w1|w3] blk
            _weight_spec((bh, dim), lambda i, k: (k, 0), wbuf),      # w2 row blk
        ]
        out_specs = pl.BlockSpec((tm, dim), lambda i, k: (i, 0))
        scratch = [pltpu.VMEM((tm, dim), jnp.float32)]
        dims = ("parallel", "arbitrary")
    else:
        kernel = functools.partial(_ffn_kernel_single, approx=approx)
        grid = (n_row_tiles,)
        in_specs = [
            pl.BlockSpec((tm, dim), lambda i: (i, 0)),
            _weight_spec((dim, 2 * bh), lambda i: (0, 0), 1),  # constant index ->
            _weight_spec((bh, dim), lambda i: (0, 0), 1),      # single buffer
        ]
        out_specs = pl.BlockSpec((tm, dim), lambda i: (i, 0))
        scratch = []
        dims = ("parallel",)

    # TODO(synk): v7x small-M case (n_row_tiles == 1): add a second "parallel"
    # grid axis splitting the output dim across the two TensorCores.

    out = pl.pallas_call(
        kernel,
        out_shape=jax.ShapeDtypeStruct((mp, dim), x.dtype),
        grid_spec=pltpu.PrefetchScalarGridSpec(
            num_scalar_prefetch=0,
            grid=grid,
            in_specs=in_specs,
            out_specs=out_specs,
            scratch_shapes=scratch,
        ),
        compiler_params=pltpu.CompilerParams(
            dimension_semantics=dims,
            vmem_limit_bytes=vmem_limit,
        ),
        cost_estimate=pl.CostEstimate(
            flops=int(flops),
            transcendentals=int(mp * hp),
            bytes_accessed=int(bytes_accessed),
        ),
    )(x, params.w13, params.w2t)
    return out[:m]


def _ffn_reference(x, w1, w2, w3):
    h1 = x @ w1.T
    h3 = x @ w3.T
    return ((h1 * jax.nn.sigmoid(h1)) * h3) @ w2.T


if __name__ == "__main__":
    # Mirrors FeedForward(dim=128, hidden_dim=128, multiple_of=32, ffn_dim_multiplier=None)
    dim = 128
    hidden_dim_arg = 128
    multiple_of = 32
    ffn_dim_multiplier = None

    hidden_dim = int(2 * hidden_dim_arg / 3)
    if ffn_dim_multiplier is not None:
        hidden_dim = int(ffn_dim_multiplier * hidden_dim)
    hidden_dim = multiple_of * ((hidden_dim + multiple_of - 1) // multiple_of)  # -> 96

    batch, seq = 2, 8
    m = batch * seq

    key = jax.random.PRNGKey(0)
    kx, k1, k2, k3 = jax.random.split(key, 4)
    x = jax.random.normal(kx, (batch, seq, dim), dtype=jnp.float32)
    w1 = 0.02 * jax.random.truncated_normal(k1, -2.0, 2.0, (hidden_dim, dim), jnp.float32)
    w2 = 0.02 * jax.random.truncated_normal(k2, -2.0, 2.0, (dim, hidden_dim), jnp.float32)
    w3 = 0.02 * jax.random.truncated_normal(k3, -2.0, 2.0, (hidden_dim, dim), jnp.float32)

    x2d = x.reshape(m, dim)
    ref = _ffn_reference(x2d, w1, w2, w3)

    # float32 path (single-hidden-block fast path, exact reciprocal)
    params_f32 = prepare_ffn_weights(w1, w2, w3)
    out_f32 = ffn_forward(x2d, params_f32)
    jax.block_until_ready(out_f32)
    assert out_f32.shape == (m, dim)
    assert jnp.allclose(out_f32, ref, atol=1e-4, rtol=1e-4), "f32 mismatch"

    # bfloat16 production path (f32 accumulation, approx reciprocal on the EUP)
    params_bf16 = prepare_ffn_weights(w1, w2, w3, compute_dtype=jnp.bfloat16)
    out_bf16 = ffn_forward(x2d.astype(jnp.bfloat16), params_bf16)
    jax.block_until_ready(out_bf16)
    assert jnp.allclose(out_bf16.astype(jnp.float32), ref, atol=5e-3, rtol=5e-2), "bf16 mismatch"

    # Second config exercising hidden-streaming (grid (3, 3)) and M/hidden padding.
    dim2, hidden2, m2 = 256, 320, 40
    k4, k5, k6, k7 = jax.random.split(jax.random.PRNGKey(1), 4)
    x2 = jax.random.normal(k4, (m2, dim2), dtype=jnp.float32)
    w1b = 0.02 * jax.random.truncated_normal(k5, -2.0, 2.0, (hidden2, dim2), jnp.float32)
    w2b = 0.02 * jax.random.truncated_normal(k6, -2.0, 2.0, (dim2, hidden2), jnp.float32)
    w3b = 0.02 * jax.random.truncated_normal(k7, -2.0, 2.0, (hidden2, dim2), jnp.float32)
    params2 = prepare_ffn_weights(w1b, w2b, w3b, block_h=128)
    out2 = ffn_forward(x2, params2, tm=16)
    jax.block_until_ready(out2)
    ref2 = _ffn_reference(x2, w1b, w2b, w3b)
    assert jnp.allclose(out2, ref2, atol=1e-4, rtol=1e-4), "streamed mismatch"

    # Third config: decode-shaped (single row tile, hidden streamed) -> exercises
    # the deeper weight-buffering path.
    dim3, hidden3, m3 = 256, 384, 8
    k8, k9, k10, k11 = jax.random.split(jax.random.PRNGKey(2), 4)
    x3 = jax.random.normal(k8, (m3, dim3), dtype=jnp.float32)
    w1c = 0.02 * jax.random.truncated_normal(k9, -2.0, 2.0, (hidden3, dim3), jnp.float32)
    w2c = 0.02 * jax.random.truncated_normal(k10, -2.0, 2.0, (dim3, hidden3), jnp.float32)
    w3c = 0.02 * jax.random.truncated_normal(k11, -2.0, 2.0, (hidden3, dim3), jnp.float32)
    params3 = prepare_ffn_weights(w1c, w2c, w3c, block_h=128)
    out3 = ffn_forward(x3, params3)
    jax.block_until_ready(out3)
    ref3 = _ffn_reference(x3, w1c, w2c, w3c)
    assert jnp.allclose(out3, ref3, atol=1e-4, rtol=1e-4), "decode mismatch"

    print("KERNEL_OK")
</pallas_src>

<mosaic_0001>
module attributes {stable_mosaic.version = 11 : i64} {
  func.func @_ffn_kernel_single(%arg0: i32, %arg1: memref<16x128xf32, #tpu.memory_space<vmem>>, %arg2: memref<128x256xf32, #tpu.memory_space<vmem>>, %arg3: memref<128x128xf32, #tpu.memory_space<vmem>>, %arg4: memref<16x128xf32, #tpu.memory_space<vmem>>) attributes {dimension_semantics = [#tpu.dimension_semantics<parallel>], iteration_bounds = array<i64: 1>, scalar_prefetch = 0 : i64, scratch_operands = 0 : i64, tpu.core_type = #tpu.core_type<tc>, window_params = [{transform_indices = @transform_0, window_bounds = array<i64: 16, 128>}, {pipeline_mode = #tpu.pipeline_mode<synchronous>, transform_indices = @transform_1, window_bounds = array<i64: 128, 256>}, {pipeline_mode = #tpu.pipeline_mode<synchronous>, transform_indices = @transform_2, window_bounds = array<i64: 128, 128>}, {transform_indices = @transform_3, window_bounds = array<i64: 16, 128>}]} {
    %c0 = arith.constant 0 : index
    %c0_0 = arith.constant 0 : index
    %0 = vector.load %arg1[%c0, %c0_0] : memref<16x128xf32, #tpu.memory_space<vmem>>, vector<16x128xf32>
    %c0_1 = arith.constant 0 : index
    %c0_2 = arith.constant 0 : index
    %1 = vector.load %arg2[%c0_1, %c0_2] : memref<128x256xf32, #tpu.memory_space<vmem>>, vector<128x256xf32>
    %cst = arith.constant dense<0.000000e+00> : vector<16x256xf32>
    %2 = tpu.matmul %0, %1, %cst {dimension_numbers = #tpu.dot_dimension_numbers<[1], [0], [0], [1], [0, 0, 1, 1], [], []>} : vector<16x128xf32>, vector<128x256xf32>, vector<16x256xf32> -> vector<16x256xf32>
    %3 = vector.extract_strided_slice %2 {offsets = [0, 0], sizes = [16, 128], strides = [1, 1]} : vector<16x256xf32> to vector<16x128xf32>
    %4 = vector.extract_strided_slice %2 {offsets = [0, 128], sizes = [16, 128], strides = [1, 1]} : vector<16x256xf32> to vector<16x128xf32>
    %cst_3 = arith.constant -8.000000e+01 : f32
    %5 = vector.broadcast %cst_3 : f32 to vector<16x128xf32>
    %6 = arith.maximumf %3, %5 : vector<16x128xf32>
    %cst_4 = arith.constant 0.000000e+00 : f32
    %7 = vector.broadcast %cst_4 : f32 to vector<16x128xf32>
    %8 = arith.subf %7, %6 : vector<16x128xf32>
    %9 = math.exp %8 : vector<16x128xf32>
    %cst_5 = arith.constant 1.000000e+00 : f32
    %10 = vector.broadcast %cst_5 : f32 to vector<16x128xf32>
    %11 = arith.addf %10, %9 : vector<16x128xf32>
    %12 = tpu.reciprocal %11 : vector<16x128xf32> -> vector<16x128xf32>
    %13 = arith.mulf %3, %12 : vector<16x128xf32>
    %14 = arith.mulf %13, %4 : vector<16x128xf32>
    %c0_6 = arith.constant 0 : index
    %c0_7 = arith.constant 0 : index
    %15 = vector.load %arg3[%c0_6, %c0_7] : memref<128x128xf32, #tpu.memory_space<vmem>>, vector<128x128xf32>
    %cst_8 = arith.constant dense<0.000000e+00> : vector<16x128xf32>
    %16 = tpu.matmul %14, %15, %cst_8 {dimension_numbers = #tpu.dot_dimension_numbers<[1], [0], [0], [1], [0, 0, 1, 1], [], []>} : vector<16x128xf32>, vector<128x128xf32>, vector<16x128xf32> -> vector<16x128xf32>
    %c0_9 = arith.constant 0 : index
    %c0_10 = arith.constant 0 : index
    %17 = vector.load %arg4[%c0_9, %c0_10] : memref<16x128xf32, #tpu.memory_space<vmem>>, vector<16x128xf32>
    tpu.vector_store %arg4[%c0_9, %c0_10], %16 {strides = array<i32>} : memref<16x128xf32, #tpu.memory_space<vmem>>, vector<16x128xf32>,
    return
  }
  func.func @transform_0(%arg0: i32) -> (i32, i32) {
    %c0_i32 = arith.constant 0 : i32
    %c0_i32_0 = arith.constant 0 : i32
    return %arg0, %c0_i32 : i32, i32
  }
  func.func @transform_1(%arg0: i32) -> (i32, i32) {
    %c0_i32 = arith.constant 0 : i32
    %c0_i32_0 = arith.constant 0 : i32
    %c0_i32_1 = arith.constant 0 : i32
    return %c0_i32, %c0_i32_0 : i32, i32
  }
  func.func @transform_2(%arg0: i32) -> (i32, i32) {
    %c0_i32 = arith.constant 0 : i32
    %c0_i32_0 = arith.constant 0 : i32
    %c0_i32_1 = arith.constant 0 : i32
    return %c0_i32, %c0_i32_0 : i32, i32
  }
  func.func @transform_3(%arg0: i32) -> (i32, i32) {
    %c0_i32 = arith.constant 0 : i32
    %c0_i32_0 = arith.constant 0 : i32
    return %arg0, %c0_i32 : i32, i32
  }
}

</mosaic_0001>

<llo_original>
// kernel: tpu_custom_call.1
$region0: #{tpu_custom_call.1}
  #allocation0 [shape = 'u32[]', space=smem, size = 0x4, offset = 0x4, fixed_abs, tag = 'smem constant byte address 0x4 - core index']
  #allocation1 [shape = 'u32[144,128]{1,0:T(1,128)}', space=vmem, size = 0x12000, scoped, tag = 'internal scratch']
  %s0 = inlined_call_operand.hbm [shape: f32[16,128], index: 0, kind: input, shape index: {}]
  %s1 = inlined_call_operand.hbm [shape: f32[128,256], index: 1, kind: input, shape index: {}]
  %s2 = inlined_call_operand.hbm [shape: f32[128,128], index: 2, kind: input, shape index: {}]
  %s3 = inlined_call_operand.hbm [shape: f32[16,128], index: 3, kind: output, shape index: {}]
  %s4 = sld [smem:[#allocation0]]
  $region34: #{tpu_custom_call.1} parent=0
    _
  %s6 = ssub.s32 1, %s4
  %s7 = scalar_select 0, %s6, %s4
  $region1: #{tpu_custom_call.1} parent=0
    #allocation2 [shape = 'u8[8192]{0}', space=vmem, size = 0x2000, scoped, tag = 'input window, operand 0, single buffered']
    #allocation3 [shape = 's32[1]{0}', space=sflag, size = 0x4, scoped, tag = 'scoped memory for tpu_custom_call.1']
    #allocation4 [shape = 's32[1]{0}', space=sflag, size = 0x4, scoped, tag = 'scoped memory for tpu_custom_call.1']
    #allocation5 [shape = 'u8[131072]{0}', space=vmem, size = 0x20000, scoped, tag = 'input window, operand 1, single buffered']
    #allocation6 [shape = 's32[1]{0}', space=sflag, size = 0x4, scoped, tag = 'scoped memory for tpu_custom_call.1']
    #allocation7 [shape = 'u8[65536]{0}', space=vmem, size = 0x10000, scoped, tag = 'input window, operand 2, single buffered']
    #allocation8 [shape = 'u8[8192]{0}', space=vmem, size = 0x2000, scoped, tag = 'output window, operand 0, single buffered']
    %8 = vsyncpa [#allocation3], 0
    %9 = vsyncpa [#allocation6], 0
    %10 = vsyncpa [#allocation4], 0
    // Predicated region
    $region2: #{tpu_custom_call.1} parent=1 // pred_check
      _
    $region3: #{tpu_custom_call.1} parent=1 // pred_check_branch
      %12 = sbr.rel (0) target = $region5
    $region4: #{tpu_custom_call.1} parent=1 // pred_region
      %s14 = ssub.s32 256, 256
      %15 = vsyncadd [#allocation3], %s14
      %s16 = sshll.u32 [#allocation2], 4
      %s17 = int_to_ptr.vmem [resolvable:$true] %s16
      %22 = dma.hbm_to_vmem [thread:$0]  %s0, 256, %s17, [#allocation3], 128, 128, 8
    $region5: #{tpu_custom_call.1} parent=1 // pred_fallthru
      _
    // Predicated region
    $region6: #{tpu_custom_call.1} parent=1 // pred_check
      _
    $region7: #{tpu_custom_call.1} parent=1 // pred_check_branch
      %24 = sbr.rel (0) target = $region9
    $region8: #{tpu_custom_call.1} parent=1 // pred_region
      %s26 = ssub.s32 4096, 4096
      %27 = vsyncadd [#allocation6], %s26
      %s28 = sshll.u32 [#allocation5], 4
      %s29 = int_to_ptr.vmem [resolvable:$true] %s28
      %34 = dma.hbm_to_vmem [thread:$0]  %s1, 4096, %s29, [#allocation6], 256, 256, 16
    $region9: #{tpu_custom_call.1} parent=1 // pred_fallthru
      _
    // Predicated region
    $region10: #{tpu_custom_call.1} parent=1 // pred_check
      _
    $region11: #{tpu_custom_call.1} parent=1 // pred_check_branch
      %36 = sbr.rel (0) target = $region13
    $region12: #{tpu_custom_call.1} parent=1 // pred_region
      %s38 = ssub.s32 2048, 2048
      %39 = vsyncadd [#allocation6], %s38
      %s40 = sshll.u32 [#allocation7], 4
      %s41 = int_to_ptr.vmem [resolvable:$true] %s40
      %46 = dma.hbm_to_vmem [thread:$0]  %s2, 2048, %s41, [#allocation6], 128, 128, 8
    $region13: #{tpu_custom_call.1} parent=1 // pred_fallthru
      _
    // Predicated region
    $region14: #{tpu_custom_call.1} parent=1 // pred_check
      _
    $region15: #{tpu_custom_call.1} parent=1 // pred_check_branch
      %48 = sbr.rel (0) target = $region17
    $region16: #{tpu_custom_call.1} parent=1 // pred_region
      %49 = dma.done [#allocation3], 256
    $region17: #{tpu_custom_call.1} parent=1 // pred_fallthru
      _
    // Predicated region
    $region18: #{tpu_custom_call.1} parent=1 // pred_check
      _
    $region19: #{tpu_custom_call.1} parent=1 // pred_check_branch
      %51 = sbr.rel (0) target = $region21
    $region20: #{tpu_custom_call.1} parent=1 // pred_region
      %52 = dma.done [#allocation6], 4096
    $region21: #{tpu_custom_call.1} parent=1 // pred_fallthru
      _
    // Predicated region
    $region22: #{tpu_custom_call.1} parent=1 // pred_check
      _
    $region23: #{tpu_custom_call.1} parent=1 // pred_check_branch
      %54 = sbr.rel (0) target = $region25
    $region24: #{tpu_custom_call.1} parent=1 // pred_region
      %55 = dma.done [#allocation6], 2048
    $region25: #{tpu_custom_call.1} parent=1 // pred_fallthru
      _
    %v56 = vld [vmem:[#allocation2] sm:$0xff]
    %v57 = vld [vmem:[#allocation2 + $0x8] sm:$0xff]
    %v58 = vld [vmem:[#allocation5] sm:$0xff]
    %v59 = vld [vmem:[#allocation5 + $0x8] sm:$0xff]
    %v60 = vld [vmem:[#allocation5 + $0x10] sm:$0xff]
    %v61 = vld [vmem:[#allocation5 + $0x18] sm:$0xff]
    %v62 = vld [vmem:[#allocation5 + $0x20] sm:$0xff]
    %v63 = vld [vmem:[#allocation5 + $0x28] sm:$0xff]
    %v64 = vld [vmem:[#allocation5 + $0x30] sm:$0xff]
    %v65 = vld [vmem:[#allocation5 + $0x38] sm:$0xff]
    %v66 = vld [vmem:[#allocation5 + $0x40] sm:$0xff]
    %v67 = vld [vmem:[#allocation5 + $0x48] sm:$0xff]
    %v68 = vld [vmem:[#allocation5 + $0x50] sm:$0xff]
    %v69 = vld [vmem:[#allocation5 + $0x58] sm:$0xff]
    %v70 = vld [vmem:[#allocation5 + $0x60] sm:$0xff]
    %v71 = vld [vmem:[#allocation5 + $0x68] sm:$0xff]
    %v72 = vld [vmem:[#allocation5 + $0x70] sm:$0xff]
    %v73 = vld [vmem:[#allocation5 + $0x78] sm:$0xff]
    %v74 = vld [vmem:[#allocation5 + $0x80] sm:$0xff]
    %v75 = vld [vmem:[#allocation5 + $0x88] sm:$0xff]
    %v76 = vld [vmem:[#allocation5 + $0x90] sm:$0xff]
    %v77 = vld [vmem:[#allocation5 + $0x98] sm:$0xff]
    %v78 = vld [vmem:[#allocation5 + $0xa0] sm:$0xff]
    %v79 = vld [vmem:[#allocation5 + $0xa8] sm:$0xff]
    %v80 = vld [vmem:[#allocation5 + $0xb0] sm:$0xff]
    %v81 = vld [vmem:[#allocation5 + $0xb8] sm:$0xff]
    %v82 = vld [vmem:[#allocation5 + $0xc0] sm:$0xff]
    %v83 = vld [vmem:[#allocation5 + $0xc8] sm:$0xff]
    %v84 = vld [vmem:[#allocation5 + $0xd0] sm:$0xff]
    %v85 = vld [vmem:[#allocation5 + $0xd8] sm:$0xff]
    %v86 = vld [vmem:[#allocation5 + $0xe0] sm:$0xff]
    %v87 = vld [vmem:[#allocation5 + $0xe8] sm:$0xff]
    %v88 = vld [vmem:[#allocation5 + $0xf0] sm:$0xff]
    %v89 = vld [vmem:[#allocation5 + $0xf8] sm:$0xff]
    %90 = vmatprep.subr.mxu0 %v89
    %91 = vmatpush1.msra.mxu0 %v88
    %92 = vmatprep.subr.mxu0 %v87
    %93 = vmatpush1.msra.mxu0 %v86
    %94 = vmatprep.subr.mxu0 %v85
    %95 = vmatpush1.msra.mxu0 %v84
    %96 = vmatprep.subr.mxu0 %v83
    %97 = vmatpush1.msra.mxu0 %v82
    %98 = vmatprep.subr.mxu0 %v81
    %99 = vmatpush1.msra.mxu0 %v80
    %100 = vmatprep.subr.mxu0 %v79
    %101 = vmatpush1.msra.mxu0 %v78
    %102 = vmatprep.subr.mxu0 %v77
    %103 = vmatpush1.msra.mxu0 %v76
    %104 = vmatprep.subr.mxu0 %v75
    %105 = vmatpush1.msra.mxu0 %v74
    %106 = vmatprep.subr.mxu0 %v73
    %107 = vmatpush1.msra.mxu0 %v72
    %108 = vmatprep.subr.mxu0 %v71
    %109 = vmatpush1.msra.mxu0 %v70
    %110 = vmatprep.subr.mxu0 %v69
    %111 = vmatpush1.msra.mxu0 %v68
    %112 = vmatprep.subr.mxu0 %v67
    %113 = vmatpush1.msra.mxu0 %v66
    %114 = vmatprep.subr.mxu0 %v65
    %115 = vmatpush1.msra.mxu0 %v64
    %116 = vmatprep.subr.mxu0 %v63
    %117 = vmatpush1.msra.mxu0 %v62
    %118 = vmatprep.subr.mxu0 %v61
    %119 = vmatpush1.msra.mxu0 %v60
    %120 = vmatprep.subr.mxu0 %v59
    %121 = vmatpush1.msra.mxu0 %v58
    %122 = vmatprep.subr.mxu0 0.0
    %123 = vmatpush2.msra.mxu0 0.0
    %124 = vmatprep.subr.mxu0 0.0
    %125 = vmatpush2.msra.mxu0 0.0
    %126 = vmatprep.subr.mxu0 0.0
    %127 = vmatpush2.msra.mxu0 0.0
    %128 = vmatprep.subr.mxu0 0.0
    %129 = vmatpush2.msra.mxu0 0.0
    %130 = vmatprep.subr.mxu0 0.0
    %131 = vmatpush2.msra.mxu0 0.0
    %132 = vmatprep.subr.mxu0 0.0
    %133 = vmatpush2.msra.mxu0 0.0
    %134 = vmatprep.subr.mxu0 0.0
    %135 = vmatpush2.msra.mxu0 0.0
    %136 = vmatprep.subr.mxu0 0.0
    %137 = vmatpush2.msra.mxu0 0.0
    %138 = vmatprep.subr.mxu0 0.0
    %139 = vmatpush2.msra.mxu0 0.0
    %140 = vmatprep.subr.mxu0 0.0
    %141 = vmatpush2.msra.mxu0 0.0
    %142 = vmatprep.subr.mxu0 0.0
    %143 = vmatpush2.msra.mxu0 0.0
    %144 = vmatprep.subr.mxu0 0.0
    %145 = vmatpush2.msra.mxu0 0.0
    %146 = vmatprep.subr.mxu0 0.0
    %147 = vmatpush2.msra.mxu0 0.0
    %148 = vmatprep.subr.mxu0 0.0
    %149 = vmatpush2.msra.mxu0 0.0
    %150 = vmatprep.subr.mxu0 0.0
    %151 = vmatpush2.msra.mxu0 0.0
    %152 = vmatprep.subr.mxu0 0.0
    %153 = vmatpush2.msra.mxu0 0.0
    %154 = vmatprep.mubr.f32.mxu0 0.0
    %155 = vmatmul.mubr.f32.gmra.mxu0 %v56
    %v156 = vpop.f32.mrf.mxu0
    %v157 = vadd.f32 0.0, %v156
    %v158 = vpop.f32.mrf.mxu0
    %v159 = vadd.f32 0.0, %v158
    %160 = vmatprep.mubr.f32.mxu0 0.0
    %161 = vmatmul.mubr.f32.gmra.mxu0 %v57
    %v162 = vpop.f32.mrf.mxu0
    %v163 = vadd.f32 0.0, %v162
    %v164 = vpop.f32.mrf.mxu0
    %v165 = vadd.f32 0.0, %v164
    %166 = vdwg.mxu0
    %v167 = vmax.f32 %v157, -80.0
    %v168 = vmax.f32 %v163, -80.0
    %v169 = vsub.f32 0.0, %v167
    %v170 = vsub.f32 0.0, %v168
    %v171 = vmul.f32 %v169, 1.442695
    %v172 = vpow.pop %v171
    %v173 = vmul.f32 %v170, 1.442695
    %v174 = vpow.pop %v173
    %v175 = vadd.f32 %v172, 1.0
    %v176 = vadd.f32 %v174, 1.0
    %v177 = vrcp.pop %v175
    %v178 = vrcp.pop %v176
    %v179 = vmul.f32 %v157, %v177
    %v180 = vmul.f32 %v163, %v178
    %v181 = vmul.f32 %v179, %v159
    %v182 = vmul.f32 %v180, %v165
    %v183 = vld [vmem:[#allocation7] sm:$0xff]
    %v184 = vld [vmem:[#allocation7 + $0x8] sm:$0xff]
    %v185 = vld [vmem:[#allocation7 + $0x10] sm:$0xff]
    %v186 = vld [vmem:[#allocation7 + $0x18] sm:$0xff]
    %v187 = vld [vmem:[#allocation7 + $0x20] sm:$0xff]
    %v188 = vld [vmem:[#allocation7 + $0x28] sm:$0xff]
    %v189 = vld [vmem:[#allocation7 + $0x30] sm:$0xff]
    %v190 = vld [vmem:[#allocation7 + $0x38] sm:$0xff]
    %v191 = vld [vmem:[#allocation7 + $0x40] sm:$0xff]
    %v192 = vld [vmem:[#allocation7 + $0x48] sm:$0xff]
    %v193 = vld [vmem:[#allocation7 + $0x50] sm:$0xff]
    %v194 = vld [vmem:[#allocation7 + $0x58] sm:$0xff]
    %v195 = vld [vmem:[#allocation7 + $0x60] sm:$0xff]
    %v196 = vld [vmem:[#allocation7 + $0x68] sm:$0xff]
    %v197 = vld [vmem:[#allocation7 + $0x70] sm:$0xff]
    %v198 = vld [vmem:[#allocation7 + $0x78] sm:$0xff]
    %199 = vmatprep.subr.mxu0 0.0
    %200 = vmatpush1.msra.mxu0 %v198
    %201 = vmatprep.subr.mxu0 0.0
    %202 = vmatpush1.msra.mxu0 %v197
    %203 = vmatprep.subr.mxu0 0.0
    %204 = vmatpush1.msra.mxu0 %v196
    %205 = vmatprep.subr.mxu0 0.0
    %206 = vmatpush1.msra.mxu0 %v195
    %207 = vmatprep.subr.mxu0 0.0
    %208 = vmatpush1.msra.mxu0 %v194
    %209 = vmatprep.subr.mxu0 0.0
    %210 = vmatpush1.msra.mxu0 %v193
    %211 = vmatprep.subr.mxu0 0.0
    %212 = vmatpush1.msra.mxu0 %v192
    %213 = vmatprep.subr.mxu0 0.0
    %214 = vmatpush1.msra.mxu0 %v191
    %215 = vmatprep.subr.mxu0 0.0
    %216 = vmatpush1.msra.mxu0 %v190
    %217 = vmatprep.subr.mxu0 0.0
    %218 = vmatpush1.msra.mxu0 %v189
    %219 = vmatprep.subr.mxu0 0.0
    %220 = vmatpush1.msra.mxu0 %v188
    %221 = vmatprep.subr.mxu0 0.0
    %222 = vmatpush1.msra.mxu0 %v187
    %223 = vmatprep.subr.mxu0 0.0
    %224 = vmatpush1.msra.mxu0 %v186
    %225 = vmatprep.subr.mxu0 0.0
    %226 = vmatpush1.msra.mxu0 %v185
    %227 = vmatprep.subr.mxu0 0.0
    %228 = vmatpush1.msra.mxu0 %v184
    %229 = vmatprep.subr.mxu0 0.0
    %230 = vmatpush1.msra.mxu0 %v183
    %231 = vmatprep.subr.mxu0 0.0
    %232 = vmatpush2.msra.mxu0 0.0
    %233 = vmatprep.subr.mxu0 0.0
    %234 = vmatpush2.msra.mxu0 0.0
    %235 = vmatprep.subr.mxu0 0.0
    %236 = vmatpush2.msra.mxu0 0.0
    %237 = vmatprep.subr.mxu0 0.0
    %238 = vmatpush2.msra.mxu0 0.0
    %239 = vmatprep.subr.mxu0 0.0
    %240 = vmatpush2.msra.mxu0 0.0
    %241 = vmatprep.subr.mxu0 0.0
    %242 = vmatpush2.msra.mxu0 0.0
    %243 = vmatprep.subr.mxu0 0.0
    %244 = vmatpush2.msra.mxu0 0.0
    %245 = vmatprep.subr.mxu0 0.0
    %246 = vmatpush2.msra.mxu0 0.0
    %247 = vmatprep.subr.mxu0 0.0
    %248 = vmatpush2.msra.mxu0 0.0
    %249 = vmatprep.subr.mxu0 0.0
    %250 = vmatpush2.msra.mxu0 0.0
    %251 = vmatprep.subr.mxu0 0.0
    %252 = vmatpush2.msra.mxu0 0.0
    %253 = vmatprep.subr.mxu0 0.0
    %254 = vmatpush2.msra.mxu0 0.0
    %255 = vmatprep.subr.mxu0 0.0
    %256 = vmatpush2.msra.mxu0 0.0
    %257 = vmatprep.subr.mxu0 0.0
    %258 = vmatpush2.msra.mxu0 0.0
    %259 = vmatprep.subr.mxu0 0.0
    %260 = vmatpush2.msra.mxu0 0.0
    %261 = vmatprep.subr.mxu0 0.0
    %262 = vmatpush2.msra.mxu0 0.0
    %263 = vmatprep.mubr.f32.mxu0 0.0
    %264 = vmatmul.mubr.f32.gmra.mxu0 %v181
    %v265 = vpop.f32.mrf.mxu0
    %v266 = vadd.f32 0.0, %v265
    %v267 = vpop.f32.mrf.mxu0
    %268 = vmatprep.mubr.f32.mxu0 0.0
    %269 = vmatmul.mubr.f32.gmra.mxu0 %v182
    %v270 = vpop.f32.mrf.mxu0
    %v271 = vadd.f32 0.0, %v270
    %v272 = vpop.f32.mrf.mxu0
    %273 = vdwg.mxu0
    %274 = vst [vmem:[#allocation8] sm:$0xff] %v266
    %275 = vst [vmem:[#allocation8 + $0x8] sm:$0xff] %v271
    // Predicated region
    $region26: #{tpu_custom_call.1} parent=1 // pred_check
      _
    $region27: #{tpu_custom_call.1} parent=1 // pred_check_branch
      %277 = sbr.rel (0) target = $region29
    $region28: #{tpu_custom_call.1} parent=1 // pred_region
      %s279 = ssub.s32 256, 256
      %280 = vsyncadd [#allocation4], %s279
      %s281 = sshll.u32 [#allocation8], 4
      %s282 = int_to_ptr.vmem [resolvable:$true] %s281
      %287 = dma.vmem_to_hbm [thread:$0]  %s282, 256, %s3, [#allocation4], 128, 128, 8
    $region29: #{tpu_custom_call.1} parent=1 // pred_fallthru
      _
    // Predicated region
    $region30: #{tpu_custom_call.1} parent=1 // pred_check
      _
    $region31: #{tpu_custom_call.1} parent=1 // pred_check_branch
      %289 = sbr.rel (0) target = $region33
    $region32: #{tpu_custom_call.1} parent=1 // pred_region
      %290 = dma.done [#allocation4], 256
    $region33: #{tpu_custom_call.1} parent=1 // pred_fallthru
      _
    %291 = vsyncpa [#allocation3], 1
    %292 = vsyncpa [#allocation6], 1
    %293 = vsyncpa [#allocation4], 1

</llo_original>
